<compile_context>
chip_gen: v7x
topology: tpu7x:2x2x1
jax: 0.10.0
libtpu: 0.0.40
codegen_flags: <defaults>
</compile_context>

<pallas_src>
import jax
import jax.numpy as jnp
from jax.experimental import pallas as pl
from jax.experimental.pallas import tpu as pltpu

HIDDEN = 256
Q_LANES = 128        # lane-dense output width: q1 -> lane 0, q2 -> lane 1
TILE_B = 1024        # batch rows per grid step (multiple of 256; sweepable)


def _critic_kernel(sa_ref, w14_ref, b14_ref,
                   w2_ref, b2_ref, w5_ref, b5_ref,
                   w3p_ref, w6p_ref, bfin_ref,
                   q_ref):
    # ---- fused first layer for both Q heads (f32, K = state+action dim) ----
    h0 = jnp.dot(sa_ref[...], w14_ref[...],
                 preferred_element_type=jnp.float32) + b14_ref[...]
    h0 = jnp.maximum(h0, 0.0)
    h1 = h0[:, :HIDDEN]          # Q1 branch (tile-aligned 256-lane split)
    g1 = h0[:, HIDDEN:]          # Q2 branch

    # ---- second layers: 256x256, bf16-in / f32-accumulate on the MXU -------
    h2 = jnp.dot(h1.astype(jnp.bfloat16), w2_ref[...],
                 preferred_element_type=jnp.float32) + b2_ref[...]
    h2 = jnp.maximum(h2, 0.0)
    g2 = jnp.dot(g1.astype(jnp.bfloat16), w5_ref[...],
                 preferred_element_type=jnp.float32) + b5_ref[...]
    g2 = jnp.maximum(g2, 0.0)

    # ---- final projections on the MXU against lane-padded weights ----------
    # produces a lane-dense (tile_b, 128) block (unmasked vector stores).
    q = (jnp.dot(h2, w3p_ref[...], preferred_element_type=jnp.float32)
         + jnp.dot(g2, w6p_ref[...], preferred_element_type=jnp.float32)
         + bfin_ref[...])
    q_ref[...] = q.astype(q_ref.dtype)


def _round_up(x, m):
    return ((x + m - 1) // m) * m


def critic_forward(state, action, params, *, tile_b=TILE_B):
    """Fused forward pass of both Q heads.

    state:  [B, state_dim] float32
    action: [B, action_dim] float32
    returns (q1, q2), each [B, 1] float32
    """
    B, state_dim = state.shape
    action_dim = action.shape[1]
    in_dim = state_dim + action_dim

    # ---- pack parameters for the fused kernel ------------------------------
    w14 = jnp.concatenate([params["w1"], params["w4"]], axis=1)      # [in, 512] f32
    b14 = jnp.concatenate([params["b1"], params["b4"]], axis=1)      # [1, 512]
    w2 = params["w2"].astype(jnp.bfloat16)                           # [256, 256]
    b2 = params["b2"]                                                 # [1, 256]
    w5 = params["w5"].astype(jnp.bfloat16)                           # [256, 256]
    b5 = params["b5"]                                                 # [1, 256]
    # lane-padded final-layer weights: q1 lands in lane 0, q2 in lane 1.
    w3p = jnp.zeros((HIDDEN, Q_LANES), jnp.float32).at[:, 0].set(params["w3"][:, 0])
    w6p = jnp.zeros((HIDDEN, Q_LANES), jnp.float32).at[:, 1].set(params["w6"][:, 0])
    bfin = (jnp.zeros((1, Q_LANES), jnp.float32)
            .at[0, 0].set(params["b3"][0, 0])
            .at[0, 1].set(params["b6"][0, 0]))

    # ---- single packed input: one DMA stream, one fused layer-1 matmul -----
    sa = jnp.concatenate([state, action], axis=1)                     # [B, in_dim]

    # ---- batch tiling -------------------------------------------------------
    tile = min(tile_b, _round_up(B, 8))
    if B >= 512 and pl.cdiv(B, tile) < 2:
        # keep >= 2 grid steps so v7x's two TensorCores both get work
        tile = _round_up(pl.cdiv(B, 2), 256)
    n_blocks = pl.cdiv(B, tile)
    b_pad = n_blocks * tile
    if b_pad != B:
        # TODO(synk): replace this HBM pad copy with an in-kernel tail mask.
        sa = jnp.pad(sa, ((0, b_pad - B), (0, 0)))

    def const_spec(shape):
        return pl.BlockSpec(shape, lambda i: (0, 0))   # weights stay VMEM-resident

    flops = 2 * b_pad * (in_dim * 2 * HIDDEN + 2 * HIDDEN * HIDDEN
                         + 2 * HIDDEN * Q_LANES)
    bytes_accessed = (b_pad * (in_dim + Q_LANES) * 4
                      + (w14.size + b14.size) * 4
                      + (w2.size + w5.size) * 2 + (b2.size + b5.size) * 4
                      + (w3p.size + w6p.size + bfin.size) * 4)

    q = pl.pallas_call(
        _critic_kernel,
        out_shape=jax.ShapeDtypeStruct((b_pad, Q_LANES), jnp.float32),
        grid=(n_blocks,),
        in_specs=[
            pl.BlockSpec((tile, in_dim), lambda i: (i, 0)),   # sa (batch-tiled)
            const_spec((in_dim, 2 * HIDDEN)),                 # w14
            const_spec((1, 2 * HIDDEN)),                      # b14
            const_spec((HIDDEN, HIDDEN)),                     # w2 (bf16)
            const_spec((1, HIDDEN)),                          # b2
            const_spec((HIDDEN, HIDDEN)),                     # w5 (bf16)
            const_spec((1, HIDDEN)),                          # b5
            const_spec((HIDDEN, Q_LANES)),                    # w3 lane-padded
            const_spec((HIDDEN, Q_LANES)),                    # w6 lane-padded
            const_spec((1, Q_LANES)),                         # b3/b6 lane-padded
        ],
        out_specs=pl.BlockSpec((tile, Q_LANES), lambda i: (i, 0)),
        compiler_params=pltpu.CompilerParams(
            dimension_semantics=("parallel",),
            vmem_limit_bytes=32 * 1024 * 1024),
        cost_estimate=pl.CostEstimate(
            flops=flops, transcendentals=0, bytes_accessed=bytes_accessed),
    )(sa, w14, b14, w2, b2, w5, b5, w3p, w6p, bfin)

    q1 = q[:B, 0:1]
    q2 = q[:B, 1:2]
    return q1, q2


def init_critic_params(key, state_dim, action_dim):
    """Deterministic PyTorch-style Linear init (uniform +/- 1/sqrt(fan_in)).

    Weights stored transposed: [in_features, out_features]; biases [1, out].
    """
    in_dim = state_dim + action_dim
    dims = [
        (in_dim, HIDDEN),   # l1
        (HIDDEN, HIDDEN),   # l2
        (HIDDEN, 1),        # l3
        (in_dim, HIDDEN),   # l4
        (HIDDEN, HIDDEN),   # l5
        (HIDDEN, 1),        # l6
    ]
    params = {}
    for i, (fan_in, fan_out) in enumerate(dims, start=1):
        key, kw, kb = jax.random.split(key, 3)
        bound = 1.0 / jnp.sqrt(jnp.float32(fan_in))
        params[f"w{i}"] = jax.random.uniform(
            kw, (fan_in, fan_out), jnp.float32, -bound, bound)
        params[f"b{i}"] = jax.random.uniform(
            kb, (1, fan_out), jnp.float32, -bound, bound)
    return params


def critic_forward_ref(state, action, params):
    """Pure-JAX full-f32 reference (matches the PyTorch module)."""
    sa = jnp.concatenate([state, action], axis=1)
    h = jax.nn.relu(sa @ params["w1"] + params["b1"])
    h = jax.nn.relu(h @ params["w2"] + params["b2"])
    q1 = h @ params["w3"] + params["b3"]
    g = jax.nn.relu(sa @ params["w4"] + params["b4"])
    g = jax.nn.relu(g @ params["w5"] + params["b5"])
    q2 = g @ params["w6"] + params["b6"]
    return q1, q2


def critic_forward_ref_mixed(state, action, params):
    """Reference mirroring the kernel's math: f32 layer 1 & final, bf16 mid."""
    sa = jnp.concatenate([state, action], axis=1)
    w14 = jnp.concatenate([params["w1"], params["w4"]], axis=1)
    b14 = jnp.concatenate([params["b1"], params["b4"]], axis=1)
    h0 = jax.nn.relu(jnp.dot(sa, w14, preferred_element_type=jnp.float32) + b14)
    h1, g1 = h0[:, :HIDDEN], h0[:, HIDDEN:]
    h2 = jax.nn.relu(jnp.dot(h1.astype(jnp.bfloat16), params["w2"].astype(jnp.bfloat16),
                             preferred_element_type=jnp.float32) + params["b2"])
    g2 = jax.nn.relu(jnp.dot(g1.astype(jnp.bfloat16), params["w5"].astype(jnp.bfloat16),
                             preferred_element_type=jnp.float32) + params["b5"])
    q1 = h2 @ params["w3"] + params["b3"]
    q2 = g2 @ params["w6"] + params["b6"]
    return q1, q2


if __name__ == "__main__":
    state_dim, action_dim, batch = 12, 4, 8

    key = jax.random.PRNGKey(0)
    key, k_params, k_state, k_action = jax.random.split(key, 4)

    params = init_critic_params(k_params, state_dim, action_dim)
    state = jax.random.normal(k_state, (batch, state_dim), jnp.float32)
    action = jax.random.normal(k_action, (batch, action_dim), jnp.float32)

    q1, q2 = critic_forward(state, action, params)
    jax.block_until_ready((q1, q2))
    assert q1.shape == (batch, 1) and q2.shape == (batch, 1)

    # Check against a reference doing the same f32 / bf16-mid math.
    q1_m, q2_m = critic_forward_ref_mixed(state, action, params)
    assert jnp.allclose(q1, q1_m, atol=2e-2, rtol=2e-2)
    assert jnp.allclose(q2, q2_m, atol=2e-2, rtol=2e-2)

    # Loose sanity check against the full-f32 PyTorch-equivalent reference
    # (layers 2/5 run bf16-in / f32-acc on the MXU -> loosened tolerance).
    q1_r, q2_r = critic_forward_ref(state, action, params)
    assert jnp.allclose(q1, q1_r, atol=1e-1, rtol=1e-1)
    assert jnp.allclose(q2, q2_r, atol=1e-1, rtol=1e-1)

    print("KERNEL_OK")
</pallas_src>

<mosaic_0001>
module attributes {stable_mosaic.version = 11 : i64} {
  func.func @_critic_kernel(%arg0: i32, %arg1: memref<8x16xf32, #tpu.memory_space<vmem>>, %arg2: memref<16x512xf32, #tpu.memory_space<vmem>>, %arg3: memref<1x512xf32, #tpu.memory_space<vmem>>, %arg4: memref<256x256xbf16, #tpu.memory_space<vmem>>, %arg5: memref<1x256xf32, #tpu.memory_space<vmem>>, %arg6: memref<256x256xbf16, #tpu.memory_space<vmem>>, %arg7: memref<1x256xf32, #tpu.memory_space<vmem>>, %arg8: memref<256x128xf32, #tpu.memory_space<vmem>>, %arg9: memref<256x128xf32, #tpu.memory_space<vmem>>, %arg10: memref<1x128xf32, #tpu.memory_space<vmem>>, %arg11: memref<8x128xf32, #tpu.memory_space<vmem>>) attributes {dimension_semantics = [#tpu.dimension_semantics<parallel>], iteration_bounds = array<i64: 1>, scalar_prefetch = 0 : i64, scratch_operands = 0 : i64, tpu.core_type = #tpu.core_type<tc>, window_params = [{transform_indices = @transform_0, window_bounds = array<i64: 8, 16>}, {pipeline_mode = #tpu.pipeline_mode<synchronous>, transform_indices = @transform_1, window_bounds = array<i64: 16, 512>}, {pipeline_mode = #tpu.pipeline_mode<synchronous>, transform_indices = @transform_2, window_bounds = array<i64: 1, 512>}, {pipeline_mode = #tpu.pipeline_mode<synchronous>, transform_indices = @transform_3, window_bounds = array<i64: 256, 256>}, {pipeline_mode = #tpu.pipeline_mode<synchronous>, transform_indices = @transform_4, window_bounds = array<i64: 1, 256>}, {pipeline_mode = #tpu.pipeline_mode<synchronous>, transform_indices = @transform_5, window_bounds = array<i64: 256, 256>}, {pipeline_mode = #tpu.pipeline_mode<synchronous>, transform_indices = @transform_6, window_bounds = array<i64: 1, 256>}, {pipeline_mode = #tpu.pipeline_mode<synchronous>, transform_indices = @transform_7, window_bounds = array<i64: 256, 128>}, {pipeline_mode = #tpu.pipeline_mode<synchronous>, transform_indices = @transform_8, window_bounds = array<i64: 256, 128>}, {pipeline_mode = #tpu.pipeline_mode<synchronous>, transform_indices = @transform_9, window_bounds = array<i64: 1, 128>}, {transform_indices = @transform_10, window_bounds = array<i64: 8, 128>}]} {
    %c0 = arith.constant 0 : index
    %c0_0 = arith.constant 0 : index
    %0 = vector.load %arg1[%c0, %c0_0] : memref<8x16xf32, #tpu.memory_space<vmem>>, vector<8x16xf32>
    %c0_1 = arith.constant 0 : index
    %c0_2 = arith.constant 0 : index
    %1 = vector.load %arg2[%c0_1, %c0_2] : memref<16x512xf32, #tpu.memory_space<vmem>>, vector<16x512xf32>
    %cst = arith.constant dense<0.000000e+00> : vector<8x512xf32>
    %2 = tpu.matmul %0, %1, %cst {dimension_numbers = #tpu.dot_dimension_numbers<[1], [0], [0], [1], [0, 0, 1, 1], [], []>} : vector<8x16xf32>, vector<16x512xf32>, vector<8x512xf32> -> vector<8x512xf32>
    %c0_3 = arith.constant 0 : index
    %c0_4 = arith.constant 0 : index
    %3 = vector.load %arg3[%c0_3, %c0_4] : memref<1x512xf32, #tpu.memory_space<vmem>>, vector<1x512xf32>
    %4 = vector.broadcast %3 : vector<1x512xf32> to vector<8x512xf32>
    %5 = arith.addf %2, %4 : vector<8x512xf32>
    %cst_5 = arith.constant 0.000000e+00 : f32
    %6 = vector.broadcast %cst_5 : f32 to vector<8x512xf32>
    %7 = arith.maximumf %5, %6 : vector<8x512xf32>
    %8 = vector.extract_strided_slice %7 {offsets = [0, 0], sizes = [8, 256], strides = [1, 1]} : vector<8x512xf32> to vector<8x256xf32>
    %9 = vector.extract_strided_slice %7 {offsets = [0, 256], sizes = [8, 256], strides = [1, 1]} : vector<8x512xf32> to vector<8x256xf32>
    %10 = arith.truncf %8 : vector<8x256xf32> to vector<8x256xbf16>
    %c0_6 = arith.constant 0 : index
    %c0_7 = arith.constant 0 : index
    %11 = vector.load %arg4[%c0_6, %c0_7] : memref<256x256xbf16, #tpu.memory_space<vmem>>, vector<256x256xbf16>
    %cst_8 = arith.constant dense<0.000000e+00> : vector<8x256xf32>
    %12 = tpu.matmul %10, %11, %cst_8 {dimension_numbers = #tpu.dot_dimension_numbers<[1], [0], [0], [1], [0, 0, 1, 1], [], []>} : vector<8x256xbf16>, vector<256x256xbf16>, vector<8x256xf32> -> vector<8x256xf32>
    %c0_9 = arith.constant 0 : index
    %c0_10 = arith.constant 0 : index
    %13 = vector.load %arg5[%c0_9, %c0_10] : memref<1x256xf32, #tpu.memory_space<vmem>>, vector<1x256xf32>
    %14 = vector.broadcast %13 : vector<1x256xf32> to vector<8x256xf32>
    %15 = arith.addf %12, %14 : vector<8x256xf32>
    %cst_11 = arith.constant 0.000000e+00 : f32
    %16 = vector.broadcast %cst_11 : f32 to vector<8x256xf32>
    %17 = arith.maximumf %15, %16 : vector<8x256xf32>
    %18 = arith.truncf %9 : vector<8x256xf32> to vector<8x256xbf16>
    %c0_12 = arith.constant 0 : index
    %c0_13 = arith.constant 0 : index
    %19 = vector.load %arg6[%c0_12, %c0_13] : memref<256x256xbf16, #tpu.memory_space<vmem>>, vector<256x256xbf16>
    %cst_14 = arith.constant dense<0.000000e+00> : vector<8x256xf32>
    %20 = tpu.matmul %18, %19, %cst_14 {dimension_numbers = #tpu.dot_dimension_numbers<[1], [0], [0], [1], [0, 0, 1, 1], [], []>} : vector<8x256xbf16>, vector<256x256xbf16>, vector<8x256xf32> -> vector<8x256xf32>
    %c0_15 = arith.constant 0 : index
    %c0_16 = arith.constant 0 : index
    %21 = vector.load %arg7[%c0_15, %c0_16] : memref<1x256xf32, #tpu.memory_space<vmem>>, vector<1x256xf32>
    %22 = vector.broadcast %21 : vector<1x256xf32> to vector<8x256xf32>
    %23 = arith.addf %20, %22 : vector<8x256xf32>
    %cst_17 = arith.constant 0.000000e+00 : f32
    %24 = vector.broadcast %cst_17 : f32 to vector<8x256xf32>
    %25 = arith.maximumf %23, %24 : vector<8x256xf32>
    %c0_18 = arith.constant 0 : index
    %c0_19 = arith.constant 0 : index
    %26 = vector.load %arg8[%c0_18, %c0_19] : memref<256x128xf32, #tpu.memory_space<vmem>>, vector<256x128xf32>
    %cst_20 = arith.constant dense<0.000000e+00> : vector<8x128xf32>
    %27 = tpu.matmul %17, %26, %cst_20 {dimension_numbers = #tpu.dot_dimension_numbers<[1], [0], [0], [1], [0, 0, 1, 1], [], []>} : vector<8x256xf32>, vector<256x128xf32>, vector<8x128xf32> -> vector<8x128xf32>
    %c0_21 = arith.constant 0 : index
    %c0_22 = arith.constant 0 : index
    %28 = vector.load %arg9[%c0_21, %c0_22] : memref<256x128xf32, #tpu.memory_space<vmem>>, vector<256x128xf32>
    %cst_23 = arith.constant dense<0.000000e+00> : vector<8x128xf32>
    %29 = tpu.matmul %25, %28, %cst_23 {dimension_numbers = #tpu.dot_dimension_numbers<[1], [0], [0], [1], [0, 0, 1, 1], [], []>} : vector<8x256xf32>, vector<256x128xf32>, vector<8x128xf32> -> vector<8x128xf32>
    %30 = arith.addf %27, %29 : vector<8x128xf32>
    %c0_24 = arith.constant 0 : index
    %c0_25 = arith.constant 0 : index
    %31 = vector.load %arg10[%c0_24, %c0_25] : memref<1x128xf32, #tpu.memory_space<vmem>>, vector<1x128xf32>
    %32 = vector.broadcast %31 : vector<1x128xf32> to vector<8x128xf32>
    %33 = arith.addf %30, %32 : vector<8x128xf32>
    %c0_26 = arith.constant 0 : index
    %c0_27 = arith.constant 0 : index
    %34 = vector.load %arg11[%c0_26, %c0_27] : memref<8x128xf32, #tpu.memory_space<vmem>>, vector<8x128xf32>
    tpu.vector_store %arg11[%c0_26, %c0_27], %33 {strides = array<i32>} : memref<8x128xf32, #tpu.memory_space<vmem>>, vector<8x128xf32>,
    return
  }
  func.func @transform_0(%arg0: i32) -> (i32, i32) {
    %c0_i32 = arith.constant 0 : i32
    %c0_i32_0 = arith.constant 0 : i32
    return %arg0, %c0_i32 : i32, i32
  }
  func.func @transform_1(%arg0: i32) -> (i32, i32) {
    %c0_i32 = arith.constant 0 : i32
    %c0_i32_0 = arith.constant 0 : i32
    %c0_i32_1 = arith.constant 0 : i32
    return %c0_i32, %c0_i32_0 : i32, i32
  }
  func.func @transform_2(%arg0: i32) -> (i32, i32) {
    %c0_i32 = arith.constant 0 : i32
    %c0_i32_0 = arith.constant 0 : i32
    %c0_i32_1 = arith.constant 0 : i32
    return %c0_i32, %c0_i32_0 : i32, i32
  }
  func.func @transform_3(%arg0: i32) -> (i32, i32) {
    %c0_i32 = arith.constant 0 : i32
    %c0_i32_0 = arith.constant 0 : i32
    %c0_i32_1 = arith.constant 0 : i32
    return %c0_i32, %c0_i32_0 : i32, i32
  }
  func.func @transform_4(%arg0: i32) -> (i32, i32) {
    %c0_i32 = arith.constant 0 : i32
    %c0_i32_0 = arith.constant 0 : i32
    %c0_i32_1 = arith.constant 0 : i32
    return %c0_i32, %c0_i32_0 : i32, i32
  }
  func.func @transform_5(%arg0: i32) -> (i32, i32) {
    %c0_i32 = arith.constant 0 : i32
    %c0_i32_0 = arith.constant 0 : i32
    %c0_i32_1 = arith.constant 0 : i32
    return %c0_i32, %c0_i32_0 : i32, i32
  }
  func.func @transform_6(%arg0: i32) -> (i32, i32) {
    %c0_i32 = arith.constant 0 : i32
    %c0_i32_0 = arith.constant 0 : i32
    %c0_i32_1 = arith.constant 0 : i32
    return %c0_i32, %c0_i32_0 : i32, i32
  }
  func.func @transform_7(%arg0: i32) -> (i32, i32) {
    %c0_i32 = arith.constant 0 : i32
    %c0_i32_0 = arith.constant 0 : i32
    %c0_i32_1 = arith.constant 0 : i32
    return %c0_i32, %c0_i32_0 : i32, i32
  }
  func.func @transform_8(%arg0: i32) -> (i32, i32) {
    %c0_i32 = arith.constant 0 : i32
    %c0_i32_0 = arith.constant 0 : i32
    %c0_i32_1 = arith.constant 0 : i32
    return %c0_i32, %c0_i32_0 : i32, i32
  }
  func.func @transform_9(%arg0: i32) -> (i32, i32) {
    %c0_i32 = arith.constant 0 : i32
    %c0_i32_0 = arith.constant 0 : i32
    %c0_i32_1 = arith.constant 0 : i32
    return %c0_i32, %c0_i32_0 : i32, i32
  }
  func.func @transform_10(%arg0: i32) -> (i32, i32) {
    %c0_i32 = arith.constant 0 : i32
    %c0_i32_0 = arith.constant 0 : i32
    return %arg0, %c0_i32 : i32, i32
  }
}

</mosaic_0001>

<llo_original>
// kernel: tpu_custom_call.1
$region0: #{tpu_custom_call.1}
  #allocation0 [shape = 'u32[]', space=smem, size = 0x4, offset = 0x4, fixed_abs, tag = 'smem constant byte address 0x4 - core index']
  #allocation1 [shape = 'u32[144,128]{1,0:T(1,128)}', space=vmem, size = 0x12000, scoped, tag = 'internal scratch']
  %s0 = inlined_call_operand.hbm [shape: f32[8,16], index: 0, kind: input, shape index: {}]
  %s1 = inlined_call_operand.hbm [shape: f32[16,512], index: 1, kind: input, shape index: {}]
  %s2 = inlined_call_operand.vmem [shape: f32[1,512], index: 2, kind: input, shape index: {}]
  %s3 = inlined_call_operand.hbm [shape: bf16[256,256], index: 3, kind: input, shape index: {}]
  %s4 = inlined_call_operand.vmem [shape: f32[1,256], index: 4, kind: input, shape index: {}]
  %s5 = inlined_call_operand.hbm [shape: bf16[256,256], index: 5, kind: input, shape index: {}]
  %s6 = inlined_call_operand.vmem [shape: f32[1,256], index: 6, kind: input, shape index: {}]
  %s7 = inlined_call_operand.hbm [shape: f32[256,128], index: 7, kind: input, shape index: {}]
  %s8 = inlined_call_operand.hbm [shape: f32[256,128], index: 8, kind: input, shape index: {}]
  %s9 = inlined_call_operand.vmem [shape: f32[1,128], index: 9, kind: input, shape index: {}]
  %s10 = inlined_call_operand.hbm [shape: f32[8,128], index: 10, kind: output, shape index: {}]
  %s11 = sld [smem:[#allocation0]]
  $region74: #{tpu_custom_call.1} parent=0
    _
  %s13 = ssub.s32 1, %s11
  %s14 = scalar_select 0, %s13, %s11
  $region1: #{tpu_custom_call.1} parent=0
    #allocation2 [shape = 'u8[4096]{0}', space=vmem, size = 0x1000, scoped, tag = 'input window, operand 0, single buffered']
    #allocation3 [shape = 's32[1]{0}', space=sflag, size = 0x4, scoped, tag = 'scoped memory for tpu_custom_call.1']
    #allocation4 [shape = 's32[1]{0}', space=sflag, size = 0x4, scoped, tag = 'scoped memory for tpu_custom_call.1']
    #allocation5 [shape = 'u8[32768]{0}', space=vmem, size = 0x8000, scoped, tag = 'input window, operand 1, single buffered']
    #allocation6 [shape = 's32[1]{0}', space=sflag, size = 0x4, scoped, tag = 'scoped memory for tpu_custom_call.1']
    #allocation7 [shape = 'u8[131072]{0}', space=vmem, size = 0x20000, scoped, tag = 'input window, operand 3, single buffered']
    #allocation8 [shape = 'u8[131072]{0}', space=vmem, size = 0x20000, scoped, tag = 'input window, operand 5, single buffered']
    #allocation9 [shape = 's32[1]{0}', space=sflag, size = 0x4, scoped, tag = 'scoped memory for tpu_custom_call.1']
    #allocation10 [shape = 'u8[131072]{0}', space=vmem, size = 0x20000, scoped, tag = 'input window, operand 7, single buffered']
    #allocation11 [shape = 'u8[131072]{0}', space=vmem, size = 0x20000, scoped, tag = 'input window, operand 8, single buffered']
    #allocation12 [shape = 's32[1]{0}', space=sflag, size = 0x4, scoped, tag = 'scoped memory for tpu_custom_call.1']
    #allocation13 [shape = 'u8[4096]{0}', space=vmem, size = 0x1000, scoped, tag = 'output window, operand 0, single buffered']
    %15 = vsyncpa [#allocation3], 0
    %16 = vsyncpa [#allocation6], 0
    %17 = vsyncpa [#allocation9], 0
    %18 = vsyncpa [#allocation12], 0
    %19 = vsyncpa [#allocation4], 0
    // Predicated region
    $region2: #{tpu_custom_call.1} parent=1 // pred_check
      _
    $region3: #{tpu_custom_call.1} parent=1 // pred_check_branch
      %21 = sbr.rel (0) target = $region5
    $region4: #{tpu_custom_call.1} parent=1 // pred_region
      %s23 = ssub.s32 128, 128
      %24 = vsyncadd [#allocation3], %s23
      %s26 = sshll.u32 [#allocation2], 4
      %s27 = int_to_ptr.vmem [resolvable:$true] %s26
      %29 = dma.hbm_to_vmem [thread:$0]  %s0, 128, %s27, [#allocation3]
    $region5: #{tpu_custom_call.1} parent=1 // pred_fallthru
      _
    // Predicated region
    $region6: #{tpu_custom_call.1} parent=1 // pred_check
      _
    $region7: #{tpu_custom_call.1} parent=1 // pred_check_branch
      %31 = sbr.rel (0) target = $region9
    $region8: #{tpu_custom_call.1} parent=1 // pred_region
      %s33 = ssub.s32 1024, 1024
      %34 = vsyncadd [#allocation6], %s33
      %s35 = sshll.u32 [#allocation5], 4
      %s36 = int_to_ptr.vmem [resolvable:$true] %s35
      %41 = dma.hbm_to_vmem [thread:$0]  %s1, 1024, %s36, [#allocation6], 512, 512, 32
    $region9: #{tpu_custom_call.1} parent=1 // pred_fallthru
      _
    // Predicated region
    $region10: #{tpu_custom_call.1} parent=1 // pred_check
      _
    $region11: #{tpu_custom_call.1} parent=1 // pred_check_branch
      %43 = sbr.rel (0) target = $region13
    $region12: #{tpu_custom_call.1} parent=1 // pred_region
      _
    $region13: #{tpu_custom_call.1} parent=1 // pred_fallthru
      _
    // Predicated region
    $region14: #{tpu_custom_call.1} parent=1 // pred_check
      _
    $region15: #{tpu_custom_call.1} parent=1 // pred_check_branch
      %45 = sbr.rel (0) target = $region17
    $region16: #{tpu_custom_call.1} parent=1 // pred_region
      %s47 = ssub.s32 4096, 4096
      %48 = vsyncadd [#allocation6], %s47
      %s49 = sshll.u32 [#allocation7], 4
      %s50 = int_to_ptr.vmem [resolvable:$true] %s49
      %55 = dma.hbm_to_vmem [thread:$0]  %s3, 4096, %s50, [#allocation6], 128, 128, 8
    $region17: #{tpu_custom_call.1} parent=1 // pred_fallthru
      _
    // Predicated region
    $region18: #{tpu_custom_call.1} parent=1 // pred_check
      _
    $region19: #{tpu_custom_call.1} parent=1 // pred_check_branch
      %57 = sbr.rel (0) target = $region21
    $region20: #{tpu_custom_call.1} parent=1 // pred_region
      _
    $region21: #{tpu_custom_call.1} parent=1 // pred_fallthru
      _
    // Predicated region
    $region22: #{tpu_custom_call.1} parent=1 // pred_check
      _
    $region23: #{tpu_custom_call.1} parent=1 // pred_check_branch
      %59 = sbr.rel (0) target = $region25
    $region24: #{tpu_custom_call.1} parent=1 // pred_region
      %s61 = ssub.s32 4096, 4096
      %62 = vsyncadd [#allocation9], %s61
      %s63 = sshll.u32 [#allocation8], 4
      %s64 = int_to_ptr.vmem [resolvable:$true] %s63
      %69 = dma.hbm_to_vmem [thread:$0]  %s5, 4096, %s64, [#allocation9], 128, 128, 8
    $region25: #{tpu_custom_call.1} parent=1 // pred_fallthru
      _
    // Predicated region
    $region26: #{tpu_custom_call.1} parent=1 // pred_check
      _
    $region27: #{tpu_custom_call.1} parent=1 // pred_check_branch
      %71 = sbr.rel (0) target = $region29
    $region28: #{tpu_custom_call.1} parent=1 // pred_region
      _
    $region29: #{tpu_custom_call.1} parent=1 // pred_fallthru
      _
    // Predicated region
    $region30: #{tpu_custom_call.1} parent=1 // pred_check
      _
    $region31: #{tpu_custom_call.1} parent=1 // pred_check_branch
      %73 = sbr.rel (0) target = $region33
    $region32: #{tpu_custom_call.1} parent=1 // pred_region
      %s75 = ssub.s32 4096, 4096
      %76 = vsyncadd [#allocation9], %s75
      %s77 = sshll.u32 [#allocation10], 4
      %s78 = int_to_ptr.vmem [resolvable:$true] %s77
      %83 = dma.hbm_to_vmem [thread:$0]  %s7, 4096, %s78, [#allocation9], 128, 128, 8
    $region33: #{tpu_custom_call.1} parent=1 // pred_fallthru
      _
    // Predicated region
    $region34: #{tpu_custom_call.1} parent=1 // pred_check
      _
    $region35: #{tpu_custom_call.1} parent=1 // pred_check_branch
      %85 = sbr.rel (0) target = $region37
    $region36: #{tpu_custom_call.1} parent=1 // pred_region
      %s87 = ssub.s32 4096, 4096
      %88 = vsyncadd [#allocation12], %s87
      %s89 = sshll.u32 [#allocation11], 4
      %s90 = int_to_ptr.vmem [resolvable:$true] %s89
      %95 = dma.hbm_to_vmem [thread:$0]  %s8, 4096, %s90, [#allocation12], 128, 128, 8
    $region37: #{tpu_custom_call.1} parent=1 // pred_fallthru
      _
    // Predicated region
    $region38: #{tpu_custom_call.1} parent=1 // pred_check
      _
    $region39: #{tpu_custom_call.1} parent=1 // pred_check_branch
      %97 = sbr.rel (0) target = $region41
    $region40: #{tpu_custom_call.1} parent=1 // pred_region
      _
    $region41: #{tpu_custom_call.1} parent=1 // pred_fallthru
      _
    // Predicated region
    $region42: #{tpu_custom_call.1} parent=1 // pred_check
      _
    $region43: #{tpu_custom_call.1} parent=1 // pred_check_branch
      %99 = sbr.rel (0) target = $region45
    $region44: #{tpu_custom_call.1} parent=1 // pred_region
      %100 = dma.done [#allocation3], 128
    $region45: #{tpu_custom_call.1} parent=1 // pred_fallthru
      _
    // Predicated region
    $region46: #{tpu_custom_call.1} parent=1 // pred_check
      _
    $region47: #{tpu_custom_call.1} parent=1 // pred_check_branch
      %102 = sbr.rel (0) target = $region49
    $region48: #{tpu_custom_call.1} parent=1 // pred_region
      %103 = dma.done [#allocation6], 1024
    $region49: #{tpu_custom_call.1} parent=1 // pred_fallthru
      _
    // Predicated region
    $region50: #{tpu_custom_call.1} parent=1 // pred_check
      _
    $region51: #{tpu_custom_call.1} parent=1 // pred_check_branch
      %105 = sbr.rel (0) target = $region53
    $region52: #{tpu_custom_call.1} parent=1 // pred_region
      %106 = dma.done [#allocation6], 4096
    $region53: #{tpu_custom_call.1} parent=1 // pred_fallthru
      _
    // Predicated region
    $region54: #{tpu_custom_call.1} parent=1 // pred_check
      _
    $region55: #{tpu_custom_call.1} parent=1 // pred_check_branch
      %108 = sbr.rel (0) target = $region57
    $region56: #{tpu_custom_call.1} parent=1 // pred_region
      %109 = dma.done [#allocation9], 4096
    $region57: #{tpu_custom_call.1} parent=1 // pred_fallthru
      _
    // Predicated region
    $region58: #{tpu_custom_call.1} parent=1 // pred_check
      _
    $region59: #{tpu_custom_call.1} parent=1 // pred_check_branch
      %111 = sbr.rel (0) target = $region61
    $region60: #{tpu_custom_call.1} parent=1 // pred_region
      %112 = dma.done [#allocation9], 4096
    $region61: #{tpu_custom_call.1} parent=1 // pred_fallthru
      _
    // Predicated region
    $region62: #{tpu_custom_call.1} parent=1 // pred_check
      _
    $region63: #{tpu_custom_call.1} parent=1 // pred_check_branch
      %114 = sbr.rel (0) target = $region65
    $region64: #{tpu_custom_call.1} parent=1 // pred_region
      %115 = dma.done [#allocation12], 4096
    $region65: #{tpu_custom_call.1} parent=1 // pred_fallthru
      _
    %v116 = vld [vmem:[#allocation2] sm:$0xff]
    %v117 = vld [vmem:[#allocation5] sm:$0xff]
    %v118 = vld [vmem:[#allocation5 + $0x8] sm:$0xff]
    %v119 = vld [vmem:[#allocation5 + $0x10] sm:$0xff]
    %v120 = vld [vmem:[#allocation5 + $0x18] sm:$0xff]
    %v121 = vld [vmem:[#allocation5 + $0x20] sm:$0xff]
    %v122 = vld [vmem:[#allocation5 + $0x28] sm:$0xff]
    %v123 = vld [vmem:[#allocation5 + $0x30] sm:$0xff]
    %v124 = vld [vmem:[#allocation5 + $0x38] sm:$0xff]
    %v125 = vld [vmem:[%s2] sm:$0xf]
    %v127 = vlaneseq
    %v128 = vshrl.u32 %v127, 7
    %v129 = vsub.s32 0, %v128
    %v130 = vrot.slane %v125, %v129
    %v131 = vlaneseq
    %v132 = vshrl.u32 %v131, 7
    %v133 = vsub.s32 1, %v132
    %v134 = vrot.slane %v125, %v133
    %v135 = vlaneseq
    %v136 = vshrl.u32 %v135, 7
    %v137 = vsub.s32 2, %v136
    %v138 = vrot.slane %v125, %v137
    %v139 = vlaneseq
    %v140 = vshrl.u32 %v139, 7
    %v141 = vsub.s32 3, %v140
    %v142 = vrot.slane %v125, %v141
    %vm147 = vcmask 130048
    %v149 = vsel %vm147, %v116, 0
    %151 = vmatprep.subr.mxu0 %v118
    %152 = vmatpush1.msra.mxu0 %v117
    %153 = vmatprep.subr.mxu0 %v122
    %154 = vmatpush1.msra.mxu0 %v121
    %155 = vmatprep.subr.mxu0 0.0
    %156 = vmatpush1.msra.mxu0 0.0
    %157 = vmatprep.subr.mxu0 0.0
    %158 = vmatpush1.msra.mxu0 0.0
    %159 = vmatprep.subr.mxu0 0.0
    %160 = vmatpush1.msra.mxu0 0.0
    %161 = vmatprep.subr.mxu0 0.0
    %162 = vmatpush1.msra.mxu0 0.0
    %163 = vmatprep.subr.mxu0 0.0
    %164 = vmatpush1.msra.mxu0 0.0
    %165 = vmatprep.subr.mxu0 0.0
    %166 = vmatpush1.msra.mxu0 0.0
    %167 = vmatprep.subr.mxu0 0.0
    %168 = vmatpush1.msra.mxu0 0.0
    %169 = vmatprep.subr.mxu0 0.0
    %170 = vmatpush1.msra.mxu0 0.0
    %171 = vmatprep.subr.mxu0 0.0
    %172 = vmatpush1.msra.mxu0 0.0
    %173 = vmatprep.subr.mxu0 0.0
    %174 = vmatpush1.msra.mxu0 0.0
    %175 = vmatprep.subr.mxu0 0.0
    %176 = vmatpush1.msra.mxu0 0.0
    %177 = vmatprep.subr.mxu0 0.0
    %178 = vmatpush1.msra.mxu0 0.0
    %179 = vmatprep.subr.mxu0 0.0
    %180 = vmatpush1.msra.mxu0 0.0
    %181 = vmatprep.subr.mxu0 0.0
    %182 = vmatpush1.msra.mxu0 0.0
    %183 = vmatprep.subr.mxu0 0.0
    %184 = vmatpush1.msra.mxu0 0.0
    %185 = vmatprep.subr.mxu0 0.0
    %186 = vmatpush1.msra.mxu0 0.0
    %187 = vmatprep.subr.mxu0 0.0
    %188 = vmatpush1.msra.mxu0 0.0
    %189 = vmatprep.subr.mxu0 0.0
    %190 = vmatpush1.msra.mxu0 0.0
    %191 = vmatprep.subr.mxu0 0.0
    %192 = vmatpush1.msra.mxu0 0.0
    %193 = vmatprep.subr.mxu0 0.0
    %194 = vmatpush1.msra.mxu0 0.0
    %195 = vmatprep.subr.mxu0 0.0
    %196 = vmatpush1.msra.mxu0 0.0
    %197 = vmatprep.subr.mxu0 0.0
    %198 = vmatpush1.msra.mxu0 0.0
    %199 = vmatprep.subr.mxu0 0.0
    %200 = vmatpush1.msra.mxu0 0.0
    %201 = vmatprep.subr.mxu0 0.0
    %202 = vmatpush1.msra.mxu0 0.0
    %203 = vmatprep.subr.mxu0 0.0
    %204 = vmatpush1.msra.mxu0 0.0
    %205 = vmatprep.subr.mxu0 0.0
    %206 = vmatpush1.msra.mxu0 0.0
    %207 = vmatprep.subr.mxu0 0.0
    %208 = vmatpush1.msra.mxu0 0.0
    %209 = vmatprep.subr.mxu0 0.0
    %210 = vmatpush1.msra.mxu0 0.0
    %211 = vmatprep.subr.mxu0 0.0
    %212 = vmatpush1.msra.mxu0 0.0
    %213 = vmatprep.subr.mxu0 0.0
    %214 = vmatpush1.msra.mxu0 0.0
    %215 = vmatprep.mubr.f32.mxu0 0.0
    %216 = vmatmul.mubr.f32.gmra.mrb[0].mxu0 %v149
    %v217 = vpop.f32.mrb[0].mxu0
    %v218 = vadd.f32 %v130, %v217
    %v219 = vpop.f32.mrb[0].mxu0
    %v220 = vadd.f32 %v134, %v219
    %221 = vdwg.mxu0
    %222 = vmatprep.subr.mxu0 %v120
    %223 = vmatpush1.msra.mxu0 %v119
    %224 = vmatprep.subr.mxu0 %v124
    %225 = vmatpush1.msra.mxu0 %v123
    %226 = vmatprep.subr.mxu0 0.0
    %227 = vmatpush1.msra.mxu0 0.0
    %228 = vmatprep.subr.mxu0 0.0
    %229 = vmatpush1.msra.mxu0 0.0
    %230 = vmatprep.subr.mxu0 0.0
    %231 = vmatpush1.msra.mxu0 0.0
    %232 = vmatprep.subr.mxu0 0.0
    %233 = vmatpush1.msra.mxu0 0.0
    %234 = vmatprep.subr.mxu0 0.0
    %235 = vmatpush1.msra.mxu0 0.0
    %236 = vmatprep.subr.mxu0 0.0
    %237 = vmatpush1.msra.mxu0 0.0
    %238 = vmatprep.subr.mxu0 0.0
    %239 = vmatpush1.msra.mxu0 0.0
    %240 = vmatprep.subr.mxu0 0.0
    %241 = vmatpush1.msra.mxu0 0.0
    %242 = vmatprep.subr.mxu0 0.0
    %243 = vmatpush1.msra.mxu0 0.0
    %244 = vmatprep.subr.mxu0 0.0
    %245 = vmatpush1.msra.mxu0 0.0
    %246 = vmatprep.subr.mxu0 0.0
    %247 = vmatpush1.msra.mxu0 0.0
    %248 = vmatprep.subr.mxu0 0.0
    %249 = vmatpush1.msra.mxu0 0.0
    %250 = vmatprep.subr.mxu0 0.0
    %251 = vmatpush1.msra.mxu0 0.0
    %252 = vmatprep.subr.mxu0 0.0
    %253 = vmatpush1.msra.mxu0 0.0
    %254 = vmatprep.subr.mxu0 0.0
    %255 = vmatpush1.msra.mxu0 0.0
    %256 = vmatprep.subr.mxu0 0.0
    %257 = vmatpush1.msra.mxu0 0.0
    %258 = vmatprep.subr.mxu0 0.0
    %259 = vmatpush1.msra.mxu0 0.0
    %260 = vmatprep.subr.mxu0 0.0
    %261 = vmatpush1.msra.mxu0 0.0
    %262 = vmatprep.subr.mxu0 0.0
    %263 = vmatpush1.msra.mxu0 0.0
    %264 = vmatprep.subr.mxu0 0.0
    %265 = vmatpush1.msra.mxu0 0.0
    %266 = vmatprep.subr.mxu0 0.0
    %267 = vmatpush1.msra.mxu0 0.0
    %268 = vmatprep.subr.mxu0 0.0
    %269 = vmatpush1.msra.mxu0 0.0
    %270 = vmatprep.subr.mxu0 0.0
    %271 = vmatpush1.msra.mxu0 0.0
    %272 = vmatprep.subr.mxu0 0.0
    %273 = vmatpush1.msra.mxu0 0.0
    %274 = vmatprep.subr.mxu0 0.0
    %275 = vmatpush1.msra.mxu0 0.0
    %276 = vmatprep.subr.mxu0 0.0
    %277 = vmatpush1.msra.mxu0 0.0
    %278 = vmatprep.subr.mxu0 0.0
    %279 = vmatpush1.msra.mxu0 0.0
    %280 = vmatprep.subr.mxu0 0.0
    %281 = vmatpush1.msra.mxu0 0.0
    %282 = vmatprep.subr.mxu0 0.0
    %283 = vmatpush1.msra.mxu0 0.0
    %284 = vmatprep.subr.mxu0 0.0
    %285 = vmatpush1.msra.mxu0 0.0
    %286 = vmatprep.mubr.f32.mxu0 0.0
    %287 = vmatmul.mubr.f32.gmra.mrb[0].mxu0 %v149
    %v288 = vpop.f32.mrb[0].mxu0
    %v289 = vadd.f32 %v138, %v288
    %v290 = vpop.f32.mrb[0].mxu0
    %v291 = vadd.f32 %v142, %v290
    %292 = vdwg.mxu0
    %v293 = vmax.f32 %v218, 0.0
    %v294 = vmax.f32 %v220, 0.0
    %v295 = vmax.f32 %v289, 0.0
    %v296 = vmax.f32 %v291, 0.0
    %v297 = vpack.c.bf16 %v293, %v293
    %v298 = vpack.c.bf16 %v294, %v294
    %v299 = vld [vmem:[#allocation7] sm:$0xff]
    %v300 = vld [vmem:[#allocation7 + $0x8] sm:$0xff]
    %v301 = vld [vmem:[#allocation7 + $0x10] sm:$0xff]
    %v302 = vld [vmem:[#allocation7 + $0x18] sm:$0xff]
    %v303 = vld [vmem:[#allocation7 + $0x20] sm:$0xff]
    %v304 = vld [vmem:[#allocation7 + $0x28] sm:$0xff]
    %v305 = vld [vmem:[#allocation7 + $0x30] sm:$0xff]
    %v306 = vld [vmem:[#allocation7 + $0x38] sm:$0xff]
    %v307 = vld [vmem:[#allocation7 + $0x40] sm:$0xff]
    %v308 = vld [vmem:[#allocation7 + $0x48] sm:$0xff]
    %v309 = vld [vmem:[#allocation7 + $0x50] sm:$0xff]
    %v310 = vld [vmem:[#allocation7 + $0x58] sm:$0xff]
    %v311 = vld [vmem:[#allocation7 + $0x60] sm:$0xff]
    %v312 = vld [vmem:[#allocation7 + $0x68] sm:$0xff]
    %v313 = vld [vmem:[#allocation7 + $0x70] sm:$0xff]
    %v314 = vld [vmem:[#allocation7 + $0x78] sm:$0xff]
    %v315 = vld [vmem:[#allocation7 + $0x80] sm:$0xff]
    %v316 = vld [vmem:[#allocation7 + $0x88] sm:$0xff]
    %v317 = vld [vmem:[#allocation7 + $0x90] sm:$0xff]
    %v318 = vld [vmem:[#allocation7 + $0x98] sm:$0xff]
    %v319 = vld [vmem:[#allocation7 + $0xa0] sm:$0xff]
    %v320 = vld [vmem:[#allocation7 + $0xa8] sm:$0xff]
    %v321 = vld [vmem:[#allocation7 + $0xb0] sm:$0xff]
    %v322 = vld [vmem:[#allocation7 + $0xb8] sm:$0xff]
    %v323 = vld [vmem:[#allocation7 + $0xc0] sm:$0xff]
    %v324 = vld [vmem:[#allocation7 + $0xc8] sm:$0xff]
    %v325 = vld [vmem:[#allocation7 + $0xd0] sm:$0xff]
    %v326 = vld [vmem:[#allocation7 + $0xd8] sm:$0xff]
    %v327 = vld [vmem:[#allocation7 + $0xe0] sm:$0xff]
    %v328 = vld [vmem:[#allocation7 + $0xe8] sm:$0xff]
    %v329 = vld [vmem:[#allocation7 + $0xf0] sm:$0xff]
    %v330 = vld [vmem:[#allocation7 + $0xf8] sm:$0xff]
    %v331 = vld [vmem:[%s4] sm:$0x3]
    %v333 = vlaneseq
    %v334 = vshrl.u32 %v333, 7
    %v335 = vsub.s32 0, %v334
    %v336 = vrot.slane %v331, %v335
    %v337 = vlaneseq
    %v338 = vshrl.u32 %v337, 7
    %v339 = vsub.s32 1, %v338
    %v340 = vrot.slane %v331, %v339
    %v375 = vunpack.c.l.b16 %v299
    %v376 = vunpack.c.h.b16 %v299
    %v377 = vunpack.c.l.b16 %v300
    %v378 = vunpack.c.h.b16 %v300
    %v379 = vunpack.c.l.b16 %v301
    %v380 = vunpack.c.h.b16 %v301
    %v381 = vunpack.c.l.b16 %v302
    %v382 = vunpack.c.h.b16 %v302
    %v383 = vunpack.c.l.b16 %v303
    %v384 = vunpack.c.h.b16 %v303
    %v385 = vunpack.c.l.b16 %v304
    %v386 = vunpack.c.h.b16 %v304
    %v387 = vunpack.c.l.b16 %v305
    %v388 = vunpack.c.h.b16 %v305
    %v389 = vunpack.c.l.b16 %v306
    %v390 = vunpack.c.h.b16 %v306
    %v391 = vunpack.c.l.b16 %v307
    %v392 = vunpack.c.h.b16 %v307
    %v393 = vunpack.c.l.b16 %v308
    %v394 = vunpack.c.h.b16 %v308
    %v395 = vunpack.c.l.b16 %v309
    %v396 = vunpack.c.h.b16 %v309
    %v397 = vunpack.c.l.b16 %v310
    %v398 = vunpack.c.h.b16 %v310
    %v399 = vunpack.c.l.b16 %v311
    %v400 = vunpack.c.h.b16 %v311
    %v401 = vunpack.c.l.b16 %v312
    %v402 = vunpack.c.h.b16 %v312
    %v403 = vunpack.c.l.b16 %v313
    %v404 = vunpack.c.h.b16 %v313
    %v405 = vunpack.c.l.b16 %v314
    %v406 = vunpack.c.h.b16 %v314
    %v407 = vunpack.c.l.b16 %v315
    %v408 = vunpack.c.h.b16 %v315
    %v409 = vunpack.c.l.b16 %v316
    %v410 = vunpack.c.h.b16 %v316
    %v411 = vunpack.c.l.b16 %v317
    %v412 = vunpack.c.h.b16 %v317
    %v413 = vunpack.c.l.b16 %v318
    %v414 = vunpack.c.h.b16 %v318
    %v415 = vunpack.c.l.b16 %v319
    %v416 = vunpack.c.h.b16 %v319
    %v417 = vunpack.c.l.b16 %v320
    %v418 = vunpack.c.h.b16 %v320
    %v419 = vunpack.c.l.b16 %v321
    %v420 = vunpack.c.h.b16 %v321
    %v421 = vunpack.c.l.b16 %v322
    %v422 = vunpack.c.h.b16 %v322
    %v423 = vunpack.c.l.b16 %v323
    %v424 = vunpack.c.h.b16 %v323
    %v425 = vunpack.c.l.b16 %v324
    %v426 = vunpack.c.h.b16 %v324
    %v427 = vunpack.c.l.b16 %v325
    %v428 = vunpack.c.h.b16 %v325
    %v429 = vunpack.c.l.b16 %v326
    %v430 = vunpack.c.h.b16 %v326
    %v431 = vunpack.c.l.b16 %v327
    %v432 = vunpack.c.h.b16 %v327
    %v433 = vunpack.c.l.b16 %v328
    %v434 = vunpack.c.h.b16 %v328
    %v435 = vunpack.c.l.b16 %v329
    %v436 = vunpack.c.h.b16 %v329
    %v437 = vunpack.c.l.b16 %v330
    %v438 = vunpack.c.h.b16 %v330
    %v439 = vpack.c.b16 %v377, %v375
    %v440 = vpack.c.b16 %v378, %v376
    %v441 = vpack.c.b16 %v381, %v379
    %v442 = vpack.c.b16 %v382, %v380
    %v443 = vpack.c.b16 %v385, %v383
    %v444 = vpack.c.b16 %v386, %v384
    %v445 = vpack.c.b16 %v389, %v387
    %v446 = vpack.c.b16 %v390, %v388
    %v447 = vpack.c.b16 %v393, %v391
    %v448 = vpack.c.b16 %v394, %v392
    %v449 = vpack.c.b16 %v397, %v395
    %v450 = vpack.c.b16 %v398, %v396
    %v451 = vpack.c.b16 %v401, %v399
    %v452 = vpack.c.b16 %v402, %v400
    %v453 = vpack.c.b16 %v405, %v403
    %v454 = vpack.c.b16 %v406, %v404
    %v455 = vpack.c.b16 %v409, %v407
    %v456 = vpack.c.b16 %v410, %v408
    %v457 = vpack.c.b16 %v413, %v411
    %v458 = vpack.c.b16 %v414, %v412
    %v459 = vpack.c.b16 %v417, %v415
    %v460 = vpack.c.b16 %v418, %v416
    %v461 = vpack.c.b16 %v421, %v419
    %v462 = vpack.c.b16 %v422, %v420
    %v463 = vpack.c.b16 %v425, %v423
    %v464 = vpack.c.b16 %v426, %v424
    %v465 = vpack.c.b16 %v429, %v427
    %v466 = vpack.c.b16 %v430, %v428
    %v467 = vpack.c.b16 %v433, %v431
    %v468 = vpack.c.b16 %v434, %v432
    %v469 = vpack.c.b16 %v437, %v435
    %v470 = vpack.c.b16 %v438, %v436
    %503 = vmatprep.subr.bf16.mxu0 %v440
    %504 = vmatpush1.bf16.msra.mxu0 %v439
    %505 = vmatprep.subr.bf16.mxu0 %v442
    %506 = vmatpush1.bf16.msra.mxu0 %v441
    %507 = vmatprep.subr.bf16.mxu0 %v444
    %508 = vmatpush1.bf16.msra.mxu0 %v443
    %509 = vmatprep.subr.bf16.mxu0 %v446
    %510 = vmatpush1.bf16.msra.mxu0 %v445
    %511 = vmatprep.subr.bf16.mxu0 %v448
    %512 = vmatpush1.bf16.msra.mxu0 %v447
    %513 = vmatprep.subr.bf16.mxu0 %v450
    %514 = vmatpush1.bf16.msra.mxu0 %v449
    %515 = vmatprep.subr.bf16.mxu0 %v452
    %516 = vmatpush1.bf16.msra.mxu0 %v451
    %517 = vmatprep.subr.bf16.mxu0 %v454
    %518 = vmatpush1.bf16.msra.mxu0 %v453
    %519 = vmatprep.subr.bf16.mxu0 %v456
    %520 = vmatpush1.bf16.msra.mxu0 %v455
    %521 = vmatprep.subr.bf16.mxu0 %v458
    %522 = vmatpush1.bf16.msra.mxu0 %v457
    %523 = vmatprep.subr.bf16.mxu0 %v460
    %524 = vmatpush1.bf16.msra.mxu0 %v459
    %525 = vmatprep.subr.bf16.mxu0 %v462
    %526 = vmatpush1.bf16.msra.mxu0 %v461
    %527 = vmatprep.subr.bf16.mxu0 %v464
    %528 = vmatpush1.bf16.msra.mxu0 %v463
    %529 = vmatprep.subr.bf16.mxu0 %v466
    %530 = vmatpush1.bf16.msra.mxu0 %v465
    %531 = vmatprep.subr.bf16.mxu0 %v468
    %532 = vmatpush1.bf16.msra.mxu0 %v467
    %533 = vmatprep.subr.bf16.mxu0 %v470
    %534 = vmatpush1.bf16.msra.mxu0 %v469
    %535 = vmatprep.mubr.bf16.mxu0 %v298
    %536 = vmatmul.mubr.bf16.gmra.mrb[0].mxu0 %v297
    %v537 = vpop.f32.mrb[0].mxu0
    %v538 = vadd.f32 %v336, %v537
    %v539 = vpop.f32.mrb[0].mxu0
    %v540 = vadd.f32 %v340, %v539
    %v541 = vpop.f32.mrb[0].mxu0
    %v542 = vpop.f32.mrb[0].mxu0
    %543 = vdwg.mxu0
    %v544 = vmax.f32 %v538, 0.0
    %v545 = vmax.f32 %v540, 0.0
    %v546 = vpack.c.bf16 %v295, %v295
    %v547 = vpack.c.bf16 %v296, %v296
    %v548 = vld [vmem:[#allocation8] sm:$0xff]
    %v549 = vld [vmem:[#allocation8 + $0x8] sm:$0xff]
    %v550 = vld [vmem:[#allocation8 + $0x10] sm:$0xff]
    %v551 = vld [vmem:[#allocation8 + $0x18] sm:$0xff]
    %v552 = vld [vmem:[#allocation8 + $0x20] sm:$0xff]
    %v553 = vld [vmem:[#allocation8 + $0x28] sm:$0xff]
    %v554 = vld [vmem:[#allocation8 + $0x30] sm:$0xff]
    %v555 = vld [vmem:[#allocation8 + $0x38] sm:$0xff]
    %v556 = vld [vmem:[#allocation8 + $0x40] sm:$0xff]
    %v557 = vld [vmem:[#allocation8 + $0x48] sm:$0xff]
    %v558 = vld [vmem:[#allocation8 + $0x50] sm:$0xff]
    %v559 = vld [vmem:[#allocation8 + $0x58] sm:$0xff]
    %v560 = vld [vmem:[#allocation8 + $0x60] sm:$0xff]
    %v561 = vld [vmem:[#allocation8 + $0x68] sm:$0xff]
    %v562 = vld [vmem:[#allocation8 + $0x70] sm:$0xff]
    %v563 = vld [vmem:[#allocation8 + $0x78] sm:$0xff]
    %v564 = vld [vmem:[#allocation8 + $0x80] sm:$0xff]
    %v565 = vld [vmem:[#allocation8 + $0x88] sm:$0xff]
    %v566 = vld [vmem:[#allocation8 + $0x90] sm:$0xff]
    %v567 = vld [vmem:[#allocation8 + $0x98] sm:$0xff]
    %v568 = vld [vmem:[#allocation8 + $0xa0] sm:$0xff]
    %v569 = vld [vmem:[#allocation8 + $0xa8] sm:$0xff]
    %v570 = vld [vmem:[#allocation8 + $0xb0] sm:$0xff]
    %v571 = vld [vmem:[#allocation8 + $0xb8] sm:$0xff]
    %v572 = vld [vmem:[#allocation8 + $0xc0] sm:$0xff]
    %v573 = vld [vmem:[#allocation8 + $0xc8] sm:$0xff]
    %v574 = vld [vmem:[#allocation8 + $0xd0] sm:$0xff]
    %v575 = vld [vmem:[#allocation8 + $0xd8] sm:$0xff]
    %v576 = vld [vmem:[#allocation8 + $0xe0] sm:$0xff]
    %v577 = vld [vmem:[#allocation8 + $0xe8] sm:$0xff]
    %v578 = vld [vmem:[#allocation8 + $0xf0] sm:$0xff]
    %v579 = vld [vmem:[#allocation8 + $0xf8] sm:$0xff]
    %v580 = vld [vmem:[%s6] sm:$0x3]
    %v582 = vlaneseq
    %v583 = vshrl.u32 %v582, 7
    %v584 = vsub.s32 0, %v583
    %v585 = vrot.slane %v580, %v584
    %v586 = vlaneseq
    %v587 = vshrl.u32 %v586, 7
    %v588 = vsub.s32 1, %v587
    %v589 = vrot.slane %v580, %v588
    %v624 = vunpack.c.l.b16 %v548
    %v625 = vunpack.c.h.b16 %v548
    %v626 = vunpack.c.l.b16 %v549
    %v627 = vunpack.c.h.b16 %v549
    %v628 = vunpack.c.l.b16 %v550
    %v629 = vunpack.c.h.b16 %v550
    %v630 = vunpack.c.l.b16 %v551
    %v631 = vunpack.c.h.b16 %v551
    %v632 = vunpack.c.l.b16 %v552
    %v633 = vunpack.c.h.b16 %v552
    %v634 = vunpack.c.l.b16 %v553
    %v635 = vunpack.c.h.b16 %v553
    %v636 = vunpack.c.l.b16 %v554
    %v637 = vunpack.c.h.b16 %v554
    %v638 = vunpack.c.l.b16 %v555
    %v639 = vunpack.c.h.b16 %v555
    %v640 = vunpack.c.l.b16 %v556
    %v641 = vunpack.c.h.b16 %v556
    %v642 = vunpack.c.l.b16 %v557
    %v643 = vunpack.c.h.b16 %v557
    %v644 = vunpack.c.l.b16 %v558
    %v645 = vunpack.c.h.b16 %v558
    %v646 = vunpack.c.l.b16 %v559
    %v647 = vunpack.c.h.b16 %v559
    %v648 = vunpack.c.l.b16 %v560
    %v649 = vunpack.c.h.b16 %v560
    %v650 = vunpack.c.l.b16 %v561
    %v651 = vunpack.c.h.b16 %v561
    %v652 = vunpack.c.l.b16 %v562
    %v653 = vunpack.c.h.b16 %v562
    %v654 = vunpack.c.l.b16 %v563
    %v655 = vunpack.c.h.b16 %v563
    %v656 = vunpack.c.l.b16 %v564
    %v657 = vunpack.c.h.b16 %v564
    %v658 = vunpack.c.l.b16 %v565
    %v659 = vunpack.c.h.b16 %v565
    %v660 = vunpack.c.l.b16 %v566
    %v661 = vunpack.c.h.b16 %v566
    %v662 = vunpack.c.l.b16 %v567
    %v663 = vunpack.c.h.b16 %v567
    %v664 = vunpack.c.l.b16 %v568
    %v665 = vunpack.c.h.b16 %v568
    %v666 = vunpack.c.l.b16 %v569
    %v667 = vunpack.c.h.b16 %v569
    %v668 = vunpack.c.l.b16 %v570
    %v669 = vunpack.c.h.b16 %v570
    %v670 = vunpack.c.l.b16 %v571
    %v671 = vunpack.c.h.b16 %v571
    %v672 = vunpack.c.l.b16 %v572
    %v673 = vunpack.c.h.b16 %v572
    %v674 = vunpack.c.l.b16 %v573
    %v675 = vunpack.c.h.b16 %v573
    %v676 = vunpack.c.l.b16 %v574
    %v677 = vunpack.c.h.b16 %v574
    %v678 = vunpack.c.l.b16 %v575
    %v679 = vunpack.c.h.b16 %v575
    %v680 = vunpack.c.l.b16 %v576
    %v681 = vunpack.c.h.b16 %v576
    %v682 = vunpack.c.l.b16 %v577
    %v683 = vunpack.c.h.b16 %v577
    %v684 = vunpack.c.l.b16 %v578
    %v685 = vunpack.c.h.b16 %v578
    %v686 = vunpack.c.l.b16 %v579
    %v687 = vunpack.c.h.b16 %v579
    %v688 = vpack.c.b16 %v626, %v624
    %v689 = vpack.c.b16 %v627, %v625
    %v690 = vpack.c.b16 %v630, %v628
    %v691 = vpack.c.b16 %v631, %v629
    %v692 = vpack.c.b16 %v634, %v632
    %v693 = vpack.c.b16 %v635, %v633
    %v694 = vpack.c.b16 %v638, %v636
    %v695 = vpack.c.b16 %v639, %v637
    %v696 = vpack.c.b16 %v642, %v640
    %v697 = vpack.c.b16 %v643, %v641
    %v698 = vpack.c.b16 %v646, %v644
    %v699 = vpack.c.b16 %v647, %v645
    %v700 = vpack.c.b16 %v650, %v648
    %v701 = vpack.c.b16 %v651, %v649
    %v702 = vpack.c.b16 %v654, %v652
    %v703 = vpack.c.b16 %v655, %v653
    %v704 = vpack.c.b16 %v658, %v656
    %v705 = vpack.c.b16 %v659, %v657
    %v706 = vpack.c.b16 %v662, %v660
    %v707 = vpack.c.b16 %v663, %v661
    %v708 = vpack.c.b16 %v666, %v664
    %v709 = vpack.c.b16 %v667, %v665
    %v710 = vpack.c.b16 %v670, %v668
    %v711 = vpack.c.b16 %v671, %v669
    %v712 = vpack.c.b16 %v674, %v672
    %v713 = vpack.c.b16 %v675, %v673
    %v714 = vpack.c.b16 %v678, %v676
    %v715 = vpack.c.b16 %v679, %v677
    %v716 = vpack.c.b16 %v682, %v680
    %v717 = vpack.c.b16 %v683, %v681
    %v718 = vpack.c.b16 %v686, %v684
    %v719 = vpack.c.b16 %v687, %v685
    %752 = vmatprep.subr.bf16.mxu0 %v689
    %753 = vmatpush1.bf16.msra.mxu0 %v688
    %754 = vmatprep.subr.bf16.mxu0 %v691
    %755 = vmatpush1.bf16.msra.mxu0 %v690
    %756 = vmatprep.subr.bf16.mxu0 %v693
    %757 = vmatpush1.bf16.msra.mxu0 %v692
    %758 = vmatprep.subr.bf16.mxu0 %v695
    %759 = vmatpush1.bf16.msra.mxu0 %v694
    %760 = vmatprep.subr.bf16.mxu0 %v697
    %761 = vmatpush1.bf16.msra.mxu0 %v696
    %762 = vmatprep.subr.bf16.mxu0 %v699
    %763 = vmatpush1.bf16.msra.mxu0 %v698
    %764 = vmatprep.subr.bf16.mxu0 %v701
    %765 = vmatpush1.bf16.msra.mxu0 %v700
    %766 = vmatprep.subr.bf16.mxu0 %v703
    %767 = vmatpush1.bf16.msra.mxu0 %v702
    %768 = vmatprep.subr.bf16.mxu0 %v705
    %769 = vmatpush1.bf16.msra.mxu0 %v704
    %770 = vmatprep.subr.bf16.mxu0 %v707
    %771 = vmatpush1.bf16.msra.mxu0 %v706
    %772 = vmatprep.subr.bf16.mxu0 %v709
    %773 = vmatpush1.bf16.msra.mxu0 %v708
    %774 = vmatprep.subr.bf16.mxu0 %v711
    %775 = vmatpush1.bf16.msra.mxu0 %v710
    %776 = vmatprep.subr.bf16.mxu0 %v713
    %777 = vmatpush1.bf16.msra.mxu0 %v712
    %778 = vmatprep.subr.bf16.mxu0 %v715
    %779 = vmatpush1.bf16.msra.mxu0 %v714
    %780 = vmatprep.subr.bf16.mxu0 %v717
    %781 = vmatpush1.bf16.msra.mxu0 %v716
    %782 = vmatprep.subr.bf16.mxu0 %v719
    %783 = vmatpush1.bf16.msra.mxu0 %v718
    %784 = vmatprep.mubr.bf16.mxu0 %v547
    %785 = vmatmul.mubr.bf16.gmra.mrb[0].mxu0 %v546
    %v786 = vpop.f32.mrb[0].mxu0
    %v787 = vadd.f32 %v585, %v786
    %v788 = vpop.f32.mrb[0].mxu0
    %v789 = vadd.f32 %v589, %v788
    %v790 = vpop.f32.mrb[0].mxu0
    %v791 = vpop.f32.mrb[0].mxu0
    %792 = vdwg.mxu0
    %v793 = vmax.f32 %v787, 0.0
    %v794 = vmax.f32 %v789, 0.0
    %v795 = vld [vmem:[#allocation10] sm:$0xff]
    %v796 = vld [vmem:[#allocation10 + $0x8] sm:$0xff]
    %v797 = vld [vmem:[#allocation10 + $0x10] sm:$0xff]
    %v798 = vld [vmem:[#allocation10 + $0x18] sm:$0xff]
    %v799 = vld [vmem:[#allocation10 + $0x20] sm:$0xff]
    %v800 = vld [vmem:[#allocation10 + $0x28] sm:$0xff]
    %v801 = vld [vmem:[#allocation10 + $0x30] sm:$0xff]
    %v802 = vld [vmem:[#allocation10 + $0x38] sm:$0xff]
    %v803 = vld [vmem:[#allocation10 + $0x40] sm:$0xff]
    %v804 = vld [vmem:[#allocation10 + $0x48] sm:$0xff]
    %v805 = vld [vmem:[#allocation10 + $0x50] sm:$0xff]
    %v806 = vld [vmem:[#allocation10 + $0x58] sm:$0xff]
    %v807 = vld [vmem:[#allocation10 + $0x60] sm:$0xff]
    %v808 = vld [vmem:[#allocation10 + $0x68] sm:$0xff]
    %v809 = vld [vmem:[#allocation10 + $0x70] sm:$0xff]
    %v810 = vld [vmem:[#allocation10 + $0x78] sm:$0xff]
    %v811 = vld [vmem:[#allocation10 + $0x80] sm:$0xff]
    %v812 = vld [vmem:[#allocation10 + $0x88] sm:$0xff]
    %v813 = vld [vmem:[#allocation10 + $0x90] sm:$0xff]
    %v814 = vld [vmem:[#allocation10 + $0x98] sm:$0xff]
    %v815 = vld [vmem:[#allocation10 + $0xa0] sm:$0xff]
    %v816 = vld [vmem:[#allocation10 + $0xa8] sm:$0xff]
    %v817 = vld [vmem:[#allocation10 + $0xb0] sm:$0xff]
    %v818 = vld [vmem:[#allocation10 + $0xb8] sm:$0xff]
    %v819 = vld [vmem:[#allocation10 + $0xc0] sm:$0xff]
    %v820 = vld [vmem:[#allocation10 + $0xc8] sm:$0xff]
    %v821 = vld [vmem:[#allocation10 + $0xd0] sm:$0xff]
    %v822 = vld [vmem:[#allocation10 + $0xd8] sm:$0xff]
    %v823 = vld [vmem:[#allocation10 + $0xe0] sm:$0xff]
    %v824 = vld [vmem:[#allocation10 + $0xe8] sm:$0xff]
    %v825 = vld [vmem:[#allocation10 + $0xf0] sm:$0xff]
    %v826 = vld [vmem:[#allocation10 + $0xf8] sm:$0xff]
    %v827 = vld [vmem:[#allocation11] sm:$0xff]
    %v828 = vld [vmem:[#allocation11 + $0x8] sm:$0xff]
    %v829 = vld [vmem:[#allocation11 + $0x10] sm:$0xff]
    %v830 = vld [vmem:[#allocation11 + $0x18] sm:$0xff]
    %v831 = vld [vmem:[#allocation11 + $0x20] sm:$0xff]
    %v832 = vld [vmem:[#allocation11 + $0x28] sm:$0xff]
    %v833 = vld [vmem:[#allocation11 + $0x30] sm:$0xff]
    %v834 = vld [vmem:[#allocation11 + $0x38] sm:$0xff]
    %v835 = vld [vmem:[#allocation11 + $0x40] sm:$0xff]
    %v836 = vld [vmem:[#allocation11 + $0x48] sm:$0xff]
    %v837 = vld [vmem:[#allocation11 + $0x50] sm:$0xff]
    %v838 = vld [vmem:[#allocation11 + $0x58] sm:$0xff]
    %v839 = vld [vmem:[#allocation11 + $0x60] sm:$0xff]
    %v840 = vld [vmem:[#allocation11 + $0x68] sm:$0xff]
    %v841 = vld [vmem:[#allocation11 + $0x70] sm:$0xff]
    %v842 = vld [vmem:[#allocation11 + $0x78] sm:$0xff]
    %v843 = vld [vmem:[#allocation11 + $0x80] sm:$0xff]
    %v844 = vld [vmem:[#allocation11 + $0x88] sm:$0xff]
    %v845 = vld [vmem:[#allocation11 + $0x90] sm:$0xff]
    %v846 = vld [vmem:[#allocation11 + $0x98] sm:$0xff]
    %v847 = vld [vmem:[#allocation11 + $0xa0] sm:$0xff]
    %v848 = vld [vmem:[#allocation11 + $0xa8] sm:$0xff]
    %v849 = vld [vmem:[#allocation11 + $0xb0] sm:$0xff]
    %v850 = vld [vmem:[#allocation11 + $0xb8] sm:$0xff]
    %v851 = vld [vmem:[#allocation11 + $0xc0] sm:$0xff]
    %v852 = vld [vmem:[#allocation11 + $0xc8] sm:$0xff]
    %v853 = vld [vmem:[#allocation11 + $0xd0] sm:$0xff]
    %v854 = vld [vmem:[#allocation11 + $0xd8] sm:$0xff]
    %v855 = vld [vmem:[#allocation11 + $0xe0] sm:$0xff]
    %v856 = vld [vmem:[#allocation11 + $0xe8] sm:$0xff]
    %v857 = vld [vmem:[#allocation11 + $0xf0] sm:$0xff]
    %v858 = vld [vmem:[#allocation11 + $0xf8] sm:$0xff]
    %859 = vmatprep.subr.mxu0 0.0
    %860 = vmatpush1.msra.mxu0 %v827
    %861 = vmatprep.subr.mxu0 0.0
    %862 = vmatpush1.msra.mxu0 %v828
    %863 = vmatprep.subr.mxu0 0.0
    %864 = vmatpush1.msra.mxu0 %v829
    %865 = vmatprep.subr.mxu0 0.0
    %866 = vmatpush1.msra.mxu0 %v830
    %867 = vmatprep.subr.mxu0 0.0
    %868 = vmatpush1.msra.mxu0 %v831
    %869 = vmatprep.subr.mxu0 0.0
    %870 = vmatpush1.msra.mxu0 %v832
    %871 = vmatprep.subr.mxu0 0.0
    %872 = vmatpush1.msra.mxu0 %v833
    %873 = vmatprep.subr.mxu0 0.0
    %874 = vmatpush1.msra.mxu0 %v834
    %875 = vmatprep.subr.mxu0 0.0
    %876 = vmatpush1.msra.mxu0 %v835
    %877 = vmatprep.subr.mxu0 0.0
    %878 = vmatpush1.msra.mxu0 %v836
    %879 = vmatprep.subr.mxu0 0.0
    %880 = vmatpush1.msra.mxu0 %v837
    %881 = vmatprep.subr.mxu0 0.0
    %882 = vmatpush1.msra.mxu0 %v838
    %883 = vmatprep.subr.mxu0 0.0
    %884 = vmatpush1.msra.mxu0 %v839
    %885 = vmatprep.subr.mxu0 0.0
    %886 = vmatpush1.msra.mxu0 %v840
    %887 = vmatprep.subr.mxu0 0.0
    %888 = vmatpush1.msra.mxu0 %v841
    %889 = vmatprep.subr.mxu0 0.0
    %890 = vmatpush1.msra.mxu0 %v842
    %891 = vmatprep.subr.mxu0 0.0
    %892 = vmatpush1.msra.mxu0 %v843
    %893 = vmatprep.subr.mxu0 0.0
    %894 = vmatpush1.msra.mxu0 %v844
    %895 = vmatprep.subr.mxu0 0.0
    %896 = vmatpush1.msra.mxu0 %v845
    %897 = vmatprep.subr.mxu0 0.0
    %898 = vmatpush1.msra.mxu0 %v846
    %899 = vmatprep.subr.mxu0 0.0
    %900 = vmatpush1.msra.mxu0 %v847
    %901 = vmatprep.subr.mxu0 0.0
    %902 = vmatpush1.msra.mxu0 %v848
    %903 = vmatprep.subr.mxu0 0.0
    %904 = vmatpush1.msra.mxu0 %v849
    %905 = vmatprep.subr.mxu0 0.0
    %906 = vmatpush1.msra.mxu0 %v850
    %907 = vmatprep.subr.mxu0 0.0
    %908 = vmatpush1.msra.mxu0 %v851
    %909 = vmatprep.subr.mxu0 0.0
    %910 = vmatpush1.msra.mxu0 %v852
    %911 = vmatprep.subr.mxu0 0.0
    %912 = vmatpush1.msra.mxu0 %v853
    %913 = vmatprep.subr.mxu0 0.0
    %914 = vmatpush1.msra.mxu0 %v854
    %915 = vmatprep.subr.mxu0 0.0
    %916 = vmatpush1.msra.mxu0 %v855
    %917 = vmatprep.subr.mxu0 0.0
    %918 = vmatpush1.msra.mxu0 %v856
    %919 = vmatprep.subr.mxu0 0.0
    %920 = vmatpush1.msra.mxu0 %v857
    %921 = vmatprep.subr.mxu0 0.0
    %922 = vmatpush1.msra.mxu0 %v858
    %923 = vmatprep.mubr.f32.mxu0 %v794
    %924 = vmatmul.mubr.f32.gmra.mrb[0].mxu0 %v793
    %v925 = vpop.f32.mrb[0].mxu0
    %v926 = vadd.f32 0.0, %v925
    %v927 = vpop.f32.mrb[0].mxu0
    %928 = vdwg.mxu0
    %929 = vmatprep.subr.mxu0 0.0
    %930 = vmatpush1.msra.mxu0 %v795
    %931 = vmatprep.subr.mxu0 0.0
    %932 = vmatpush1.msra.mxu0 %v796
    %933 = vmatprep.subr.mxu0 0.0
    %934 = vmatpush1.msra.mxu0 %v797
    %935 = vmatprep.subr.mxu0 0.0
    %936 = vmatpush1.msra.mxu0 %v798
    %937 = vmatprep.subr.mxu0 0.0
    %938 = vmatpush1.msra.mxu0 %v799
    %939 = vmatprep.subr.mxu0 0.0
    %940 = vmatpush1.msra.mxu0 %v800
    %941 = vmatprep.subr.mxu0 0.0
    %942 = vmatpush1.msra.mxu0 %v801
    %943 = vmatprep.subr.mxu0 0.0
    %944 = vmatpush1.msra.mxu0 %v802
    %945 = vmatprep.subr.mxu0 0.0
    %946 = vmatpush1.msra.mxu0 %v803
    %947 = vmatprep.subr.mxu0 0.0
    %948 = vmatpush1.msra.mxu0 %v804
    %949 = vmatprep.subr.mxu0 0.0
    %950 = vmatpush1.msra.mxu0 %v805
    %951 = vmatprep.subr.mxu0 0.0
    %952 = vmatpush1.msra.mxu0 %v806
    %953 = vmatprep.subr.mxu0 0.0
    %954 = vmatpush1.msra.mxu0 %v807
    %955 = vmatprep.subr.mxu0 0.0
    %956 = vmatpush1.msra.mxu0 %v808
    %957 = vmatprep.subr.mxu0 0.0
    %958 = vmatpush1.msra.mxu0 %v809
    %959 = vmatprep.subr.mxu0 0.0
    %960 = vmatpush1.msra.mxu0 %v810
    %961 = vmatprep.subr.mxu0 0.0
    %962 = vmatpush1.msra.mxu0 %v811
    %963 = vmatprep.subr.mxu0 0.0
    %964 = vmatpush1.msra.mxu0 %v812
    %965 = vmatprep.subr.mxu0 0.0
    %966 = vmatpush1.msra.mxu0 %v813
    %967 = vmatprep.subr.mxu0 0.0
    %968 = vmatpush1.msra.mxu0 %v814
    %969 = vmatprep.subr.mxu0 0.0
    %970 = vmatpush1.msra.mxu0 %v815
    %971 = vmatprep.subr.mxu0 0.0
    %972 = vmatpush1.msra.mxu0 %v816
    %973 = vmatprep.subr.mxu0 0.0
    %974 = vmatpush1.msra.mxu0 %v817
    %975 = vmatprep.subr.mxu0 0.0
    %976 = vmatpush1.msra.mxu0 %v818
    %977 = vmatprep.subr.mxu0 0.0
    %978 = vmatpush1.msra.mxu0 %v819
    %979 = vmatprep.subr.mxu0 0.0
    %980 = vmatpush1.msra.mxu0 %v820
    %981 = vmatprep.subr.mxu0 0.0
    %982 = vmatpush1.msra.mxu0 %v821
    %983 = vmatprep.subr.mxu0 0.0
    %984 = vmatpush1.msra.mxu0 %v822
    %985 = vmatprep.subr.mxu0 0.0
    %986 = vmatpush1.msra.mxu0 %v823
    %987 = vmatprep.subr.mxu0 0.0
    %988 = vmatpush1.msra.mxu0 %v824
    %989 = vmatprep.subr.mxu0 0.0
    %990 = vmatpush1.msra.mxu0 %v825
    %991 = vmatprep.subr.mxu0 0.0
    %992 = vmatpush1.msra.mxu0 %v826
    %993 = vmatprep.mubr.f32.mxu0 %v545
    %994 = vmatmul.mubr.f32.gmra.mrb[0].mxu0 %v544
    %v995 = vpop.f32.mrb[0].mxu0
    %v996 = vadd.f32 %v926, %v995
    %v997 = vpop.f32.mrb[0].mxu0
    %998 = vdwg.mxu0
    %v999 = vld [vmem:[%s9] sm:$0x1]
    %v1001 = vlaneseq
    %v1002 = vshrl.u32 %v1001, 7
    %v1003 = vsub.s32 0, %v1002
    %v1004 = vrot.slane %v999, %v1003
    %v1006 = vadd.f32 %v996, %v1004
    %1007 = vst [vmem:[#allocation13] sm:$0xff] %v1006
    // Predicated region
    $region66: #{tpu_custom_call.1} parent=1 // pred_check
      _
    $region67: #{tpu_custom_call.1} parent=1 // pred_check_branch
      %1009 = sbr.rel (0) target = $region69
    $region68: #{tpu_custom_call.1} parent=1 // pred_region
      %s1011 = ssub.s32 128, 128
      %1012 = vsyncadd [#allocation4], %s1011
      %s1014 = sshll.u32 [#allocation13], 4
      %s1015 = int_to_ptr.vmem [resolvable:$true] %s1014
      %1017 = dma.vmem_to_hbm [thread:$0]  %s1015, 128, %s10, [#allocation4]
    $region69: #{tpu_custom_call.1} parent=1 // pred_fallthru
      _
    // Predicated region
    $region70: #{tpu_custom_call.1} parent=1 // pred_check
      _
    $region71: #{tpu_custom_call.1} parent=1 // pred_check_branch
      %1019 = sbr.rel (0) target = $region73
    $region72: #{tpu_custom_call.1} parent=1 // pred_region
      %1020 = dma.done [#allocation4], 128
    $region73: #{tpu_custom_call.1} parent=1 // pred_fallthru
      _
    %1021 = vsyncpa [#allocation3], 1
    %1022 = vsyncpa [#allocation6], 1
    %1023 = vsyncpa [#allocation9], 1
    %1024 = vsyncpa [#allocation12], 1
    %1025 = vsyncpa [#allocation4], 1

</llo_original>
